<compile_context>
chip_gen: v6e
topology: v6e:2x2x1
jax: 0.10.0
libtpu: 0.0.40
codegen_flags: <defaults>
</compile_context>

<pallas_src>
import jax
import jax.numpy as jnp
from jax.experimental import pallas as pl
from jax.experimental.pallas import tpu as pltpu


def _conv_matmul_kernel(t_ref, w_ref, b_ref, o_ref):
    # t_ref: (3*C_in, T)      stacked conv taps, lane axis = output columns
    # w_ref: (C_out_p, 3*C_in) resident in VMEM
    # b_ref: (C_out_p, 1)      resident in VMEM
    # o_ref: (C_out_p, T)      lane-dense stores
    acc = jnp.dot(w_ref[...], t_ref[...], preferred_element_type=jnp.float32)
    o_ref[...] = (acc + b_ref[...]).astype(o_ref.dtype)


def downsample1d(x, weight, bias, *, tile_cols=512, compute_dtype=None):
    """x: (N, C_in, L); weight: (C_out, C_in, 3); bias: (C_out,) -> (N, C_out, L_out)."""
    N, C_in, L = x.shape
    C_out, C_in_w, K = weight.shape
    assert C_in_w == C_in and K == 3
    L_out = (L + 2 * 1 - 3) // 2 + 1          # stride=2, padding=1, kernel=3

    C_out_p = ((C_out + 7) // 8) * 8          # sublane-aligned output channels
    Kc = 3 * C_in                             # stacked contraction depth

    # --- flattened weight / bias:  w2d[co, k*C_in + ci] = weight[co, ci, k] ---
    w2d = jnp.transpose(weight, (0, 2, 1)).reshape(C_out, Kc)
    w2d = jnp.pad(w2d, ((0, C_out_p - C_out), (0, 0)))
    b2 = jnp.pad(bias, (0, C_out_p - C_out)).reshape(C_out_p, 1)

    fold_batch = L_out < 128                  # lanes per batch too narrow -> fold N into lanes

    # L_out padding only needed when tiling the length axis (long-sequence path)
    if fold_batch or L_out <= tile_cols:
        TL = L_out
        L_out_p = L_out
    else:
        TL = tile_cols                        # multiple of 128
        L_out_p = pl.cdiv(L_out, TL) * TL

    # --- padded input: x_pad[.., i] == x[.., i-1]; right-pad so index 2*L_out_p exists ---
    right = 2 * L_out_p - L
    x_pad = jnp.pad(x, ((0, 0), (0, 0), (1, right)))      # (N, C_in, 2*L_out_p + 1)

    if compute_dtype is not None:             # e.g. jnp.bfloat16; accumulation stays f32
        x_pad = x_pad.astype(compute_dtype)
        w2d = w2d.astype(compute_dtype)

    if not fold_batch:
        # ---------- long-sequence path: grid (N, L_out tiles), NCL output directly ----------
        t0 = x_pad[:, :, 0:2 * L_out_p:2]                 # x_pad[2l]     (N, C_in, L_out_p)
        t1 = x_pad[:, :, 1:2 * L_out_p:2]                 # x_pad[2l + 1]
        t2 = x_pad[:, :, 2:2 * L_out_p + 1:2]             # x_pad[2l + 2]
        taps = jnp.stack([t0, t1, t2], axis=1).reshape(N, Kc, L_out_p)

        out_p = pl.pallas_call(
            _conv_matmul_kernel,
            out_shape=jax.ShapeDtypeStruct((N, C_out_p, L_out_p), x.dtype),
            grid_spec=pltpu.PrefetchScalarGridSpec(
                num_scalar_prefetch=0,
                grid=(N, L_out_p // TL),
                in_specs=[
                    pl.BlockSpec((None, Kc, TL), lambda n, i: (n, 0, i)),
                    pl.BlockSpec((C_out_p, Kc), lambda n, i: (0, 0)),   # resident weights
                    pl.BlockSpec((C_out_p, 1), lambda n, i: (0, 0)),    # resident bias
                ],
                out_specs=pl.BlockSpec((None, C_out_p, TL), lambda n, i: (n, 0, i)),
            ),
            compiler_params=pltpu.CompilerParams(
                dimension_semantics=("parallel", "parallel"),
            ),
        )(taps, w2d, b2)
        return out_p[:, :C_out, :L_out]

    # ---------- short-sequence path: fold batch into the lane axis ----------
    xt = jnp.transpose(x_pad, (1, 0, 2))                  # (C_in, N, 2*L_out + 1)
    t0 = xt[:, :, 0:2 * L_out:2]                          # (C_in, N, L_out)
    t1 = xt[:, :, 1:2 * L_out:2]
    t2 = xt[:, :, 2:2 * L_out + 1:2]
    taps = jnp.stack([t0, t1, t2], axis=0).reshape(Kc, N * L_out)

    cols = N * L_out
    if cols <= tile_cols:
        TC = cols
        cols_p = cols
    else:
        TC = tile_cols                                    # multiple of 128
        cols_p = pl.cdiv(cols, TC) * TC
        taps = jnp.pad(taps, ((0, 0), (0, cols_p - cols)))

    out2d = pl.pallas_call(
        _conv_matmul_kernel,
        out_shape=jax.ShapeDtypeStruct((C_out_p, cols_p), x.dtype),
        grid_spec=pltpu.PrefetchScalarGridSpec(
            num_scalar_prefetch=0,
            grid=(cols_p // TC,),
            in_specs=[
                pl.BlockSpec((Kc, TC), lambda i: (0, i)),
                pl.BlockSpec((C_out_p, Kc), lambda i: (0, 0)),          # resident weights
                pl.BlockSpec((C_out_p, 1), lambda i: (0, 0)),           # resident bias
            ],
            out_specs=pl.BlockSpec((C_out_p, TC), lambda i: (0, i)),
        ),
        compiler_params=pltpu.CompilerParams(
            dimension_semantics=("parallel",),
        ),
    )(taps, w2d, b2)

    out = out2d[:, :cols].reshape(C_out_p, N, L_out)
    return jnp.transpose(out, (1, 0, 2))[:, :C_out, :]


def _reference(x, weight, bias):
    out = jax.lax.conv_general_dilated(
        x, weight,
        window_strides=(2,),
        padding=((1, 1),),
        dimension_numbers=("NCH", "OIH", "NCH"),
    )
    return out + bias.reshape(1, -1, 1)


if __name__ == "__main__":
    key = jax.random.PRNGKey(0)
    k1, k2, k3 = jax.random.split(key, 3)

    # --- small shapes matching the module (batch=2, dim=4, length=16) ---
    N, C, L = 2, 4, 16
    x = jax.random.normal(k1, (N, C, L), dtype=jnp.float32)
    bound = 1.0 / (C * 3) ** 0.5   # Conv1d default init range
    weight = jax.random.uniform(k2, (C, C, 3), minval=-bound, maxval=bound, dtype=jnp.float32)
    bias = jax.random.uniform(k3, (C,), minval=-bound, maxval=bound, dtype=jnp.float32)

    out = jax.block_until_ready(downsample1d(x, weight, bias))
    ref = _reference(x, weight, bias)
    assert out.shape == ref.shape, (out.shape, ref.shape)
    assert jnp.allclose(out, ref, atol=1e-5, rtol=1e-5), float(jnp.max(jnp.abs(out - ref)))

    # --- second check: exercises the long-sequence (grid over N x L_out tiles) path ---
    N2, C2, L2 = 2, 8, 512
    x2 = jax.random.normal(k1, (N2, C2, L2), dtype=jnp.float32)
    bound2 = 1.0 / (C2 * 3) ** 0.5
    w2 = jax.random.uniform(k2, (C2, C2, 3), minval=-bound2, maxval=bound2, dtype=jnp.float32)
    b2 = jax.random.uniform(k3, (C2,), minval=-bound2, maxval=bound2, dtype=jnp.float32)

    out2 = jax.block_until_ready(downsample1d(x2, w2, b2))
    ref2 = _reference(x2, w2, b2)
    assert out2.shape == ref2.shape, (out2.shape, ref2.shape)
    assert jnp.allclose(out2, ref2, atol=1e-5, rtol=1e-5), float(jnp.max(jnp.abs(out2 - ref2)))

    print("KERNEL_OK")
</pallas_src>

<mosaic_0001>
module attributes {stable_mosaic.version = 11 : i64} {
  func.func @_conv_matmul_kernel(%arg0: i32, %arg1: memref<12x16xf32, #tpu.memory_space<vmem>>, %arg2: memref<8x12xf32, #tpu.memory_space<vmem>>, %arg3: memref<8x1xf32, #tpu.memory_space<vmem>>, %arg4: memref<8x16xf32, #tpu.memory_space<vmem>>) attributes {dimension_semantics = [#tpu.dimension_semantics<parallel>], iteration_bounds = array<i64: 1>, scalar_prefetch = 0 : i64, scratch_operands = 0 : i64, tpu.core_type = #tpu.core_type<tc>, window_params = [{transform_indices = @transform_0, window_bounds = array<i64: 12, 16>}, {pipeline_mode = #tpu.pipeline_mode<synchronous>, transform_indices = @transform_1, window_bounds = array<i64: 8, 12>}, {pipeline_mode = #tpu.pipeline_mode<synchronous>, transform_indices = @transform_2, window_bounds = array<i64: 8, 1>}, {transform_indices = @transform_3, window_bounds = array<i64: 8, 16>}]} {
    %c0 = arith.constant 0 : index
    %c0_0 = arith.constant 0 : index
    %0 = vector.load %arg2[%c0, %c0_0] : memref<8x12xf32, #tpu.memory_space<vmem>>, vector<8x12xf32>
    %c0_1 = arith.constant 0 : index
    %c0_2 = arith.constant 0 : index
    %1 = vector.load %arg1[%c0_1, %c0_2] : memref<12x16xf32, #tpu.memory_space<vmem>>, vector<12x16xf32>
    %cst = arith.constant dense<0.000000e+00> : vector<8x16xf32>
    %2 = tpu.matmul %0, %1, %cst {dimension_numbers = #tpu.dot_dimension_numbers<[1], [0], [0], [1], [0, 0, 1, 1], [], []>} : vector<8x12xf32>, vector<12x16xf32>, vector<8x16xf32> -> vector<8x16xf32>
    %c0_3 = arith.constant 0 : index
    %c0_4 = arith.constant 0 : index
    %3 = vector.load %arg3[%c0_3, %c0_4] : memref<8x1xf32, #tpu.memory_space<vmem>>, vector<8x1xf32>
    %4 = vector.broadcast %3 : vector<8x1xf32> to vector<8x16xf32>
    %5 = arith.addf %2, %4 : vector<8x16xf32>
    %c0_5 = arith.constant 0 : index
    %c0_6 = arith.constant 0 : index
    %6 = vector.load %arg4[%c0_5, %c0_6] : memref<8x16xf32, #tpu.memory_space<vmem>>, vector<8x16xf32>
    tpu.vector_store %arg4[%c0_5, %c0_6], %5 {strides = array<i32>} : memref<8x16xf32, #tpu.memory_space<vmem>>, vector<8x16xf32>,
    return
  }
  func.func @transform_0(%arg0: i32) -> (i32, i32) {
    %c0_i32 = arith.constant 0 : i32
    %c0_i32_0 = arith.constant 0 : i32
    return %c0_i32, %arg0 : i32, i32
  }
  func.func @transform_1(%arg0: i32) -> (i32, i32) {
    %c0_i32 = arith.constant 0 : i32
    %c0_i32_0 = arith.constant 0 : i32
    %c0_i32_1 = arith.constant 0 : i32
    return %c0_i32, %c0_i32_0 : i32, i32
  }
  func.func @transform_2(%arg0: i32) -> (i32, i32) {
    %c0_i32 = arith.constant 0 : i32
    %c0_i32_0 = arith.constant 0 : i32
    %c0_i32_1 = arith.constant 0 : i32
    return %c0_i32, %c0_i32_0 : i32, i32
  }
  func.func @transform_3(%arg0: i32) -> (i32, i32) {
    %c0_i32 = arith.constant 0 : i32
    %c0_i32_0 = arith.constant 0 : i32
    return %c0_i32, %arg0 : i32, i32
  }
}

</mosaic_0001>

<llo_original>
// kernel: tpu_custom_call.1
$region0: #{tpu_custom_call.1}
  #allocation0 [shape = 'u32[]', space=smem, size = 0x4, offset = 0x4, fixed_abs, tag = 'smem constant byte address 0x4 - core index']
  #allocation1 [shape = 'u32[144,128]{1,0:T(1,128)}', space=vmem, size = 0x12000, scoped, tag = 'internal scratch']
  %s0 = inlined_call_operand.hbm [shape: f32[12,16], index: 0, kind: input, shape index: {}]
  %s1 = inlined_call_operand.vmem [shape: f32[8,12], index: 1, kind: input, shape index: {}]
  %s2 = inlined_call_operand.vmem [shape: f32[8,1], index: 2, kind: input, shape index: {}]
  %s3 = inlined_call_operand.hbm [shape: f32[8,16], index: 3, kind: output, shape index: {}]
  %s4 = sld [smem:[#allocation0]]
  $region26: #{tpu_custom_call.1} parent=0
    _
  %s6 = ssub.s32 1, %s4
  %s7 = scalar_select 0, %s6, %s4
  $region1: #{tpu_custom_call.1} parent=0
    #allocation2 [shape = 'u8[8192]{0}', space=vmem, size = 0x2000, scoped, tag = 'input window, operand 0, single buffered']
    #allocation3 [shape = 's32[1]{0}', space=sflag, size = 0x4, scoped, tag = 'scoped memory for tpu_custom_call.1']
    #allocation4 [shape = 's32[1]{0}', space=sflag, size = 0x4, scoped, tag = 'scoped memory for tpu_custom_call.1']
    #allocation5 [shape = 'u8[4096]{0}', space=vmem, size = 0x1000, scoped, tag = 'output window, operand 0, single buffered']
    %8 = vsyncpa [#allocation3], 0
    %9 = vsyncpa [#allocation4], 0
    // Predicated region
    $region2: #{tpu_custom_call.1} parent=1 // pred_check
      _
    $region3: #{tpu_custom_call.1} parent=1 // pred_check_branch
      %11 = sbr.rel (0) target = $region5
    $region4: #{tpu_custom_call.1} parent=1 // pred_region
      %s13 = ssub.s32 256, 256
      %14 = vsyncadd [#allocation3], %s13
      %s15 = sshll.u32 [#allocation2], 4
      %s16 = int_to_ptr.vmem [resolvable:$true] %s15
      %21 = dma.hbm_to_vmem [thread:$0]  %s0, 256, %s16, [#allocation3], 128, 128, 8
    $region5: #{tpu_custom_call.1} parent=1 // pred_fallthru
      _
    // Predicated region
    $region6: #{tpu_custom_call.1} parent=1 // pred_check
      _
    $region7: #{tpu_custom_call.1} parent=1 // pred_check_branch
      %23 = sbr.rel (0) target = $region9
    $region8: #{tpu_custom_call.1} parent=1 // pred_region
      _
    $region9: #{tpu_custom_call.1} parent=1 // pred_fallthru
      _
    // Predicated region
    $region10: #{tpu_custom_call.1} parent=1 // pred_check
      _
    $region11: #{tpu_custom_call.1} parent=1 // pred_check_branch
      %25 = sbr.rel (0) target = $region13
    $region12: #{tpu_custom_call.1} parent=1 // pred_region
      _
    $region13: #{tpu_custom_call.1} parent=1 // pred_fallthru
      _
    // Predicated region
    $region14: #{tpu_custom_call.1} parent=1 // pred_check
      _
    $region15: #{tpu_custom_call.1} parent=1 // pred_check_branch
      %27 = sbr.rel (0) target = $region17
    $region16: #{tpu_custom_call.1} parent=1 // pred_region
      %28 = dma.done [#allocation3], 256
    $region17: #{tpu_custom_call.1} parent=1 // pred_fallthru
      _
    %v29 = vld [vmem:[%s1] sm:$0xff]
    %v30 = vld [vmem:[#allocation2] sm:$0xff]
    %v31 = vld [vmem:[#allocation2 + $0x8] sm:$0xf]
    %v32 = vld [vmem:[%s2] sm:$0xff]
    %34 = vset.pattern.permute.xlu0 0
    %35 = vperm.xlu0 %34, %v32
    %v36 = vpop.permute.xlu0 %35
    %vm38 = vcmask 97280
    %v40 = vsel %vm38, %v29, 0
    %vm42 = vcmask 1043456
    %v44 = vsel %vm42, %v31, 0
    %46 = vmatprep.subr.mxu0 0.0
    %47 = vmatpush1.msra.mxu0 0.0
    %48 = vmatprep.subr.mxu0 0.0
    %49 = vmatpush1.msra.mxu0 0.0
    %50 = vmatprep.subr.mxu0 0.0
    %51 = vmatpush1.msra.mxu0 0.0
    %52 = vmatprep.subr.mxu0 0.0
    %53 = vmatpush1.msra.mxu0 0.0
    %54 = vmatprep.subr.mxu0 0.0
    %55 = vmatpush1.msra.mxu0 0.0
    %56 = vmatprep.subr.mxu0 0.0
    %57 = vmatpush1.msra.mxu0 0.0
    %58 = vmatprep.subr.mxu0 0.0
    %59 = vmatpush1.msra.mxu0 0.0
    %60 = vmatprep.subr.mxu0 0.0
    %61 = vmatpush1.msra.mxu0 0.0
    %62 = vmatprep.subr.mxu0 0.0
    %63 = vmatpush1.msra.mxu0 0.0
    %64 = vmatprep.subr.mxu0 0.0
    %65 = vmatpush1.msra.mxu0 0.0
    %66 = vmatprep.subr.mxu0 0.0
    %67 = vmatpush1.msra.mxu0 0.0
    %68 = vmatprep.subr.mxu0 0.0
    %69 = vmatpush1.msra.mxu0 0.0
    %70 = vmatprep.subr.mxu0 0.0
    %71 = vmatpush1.msra.mxu0 0.0
    %72 = vmatprep.subr.mxu0 0.0
    %73 = vmatpush1.msra.mxu0 0.0
    %74 = vmatprep.subr.mxu0 0.0
    %75 = vmatpush1.msra.mxu0 %v44
    %76 = vmatprep.subr.mxu0 0.0
    %77 = vmatpush1.msra.mxu0 %v30
    %78 = vmatprep.subr.mxu0 0.0
    %79 = vmatpush2.msra.mxu0 0.0
    %80 = vmatprep.subr.mxu0 0.0
    %81 = vmatpush2.msra.mxu0 0.0
    %82 = vmatprep.subr.mxu0 0.0
    %83 = vmatpush2.msra.mxu0 0.0
    %84 = vmatprep.subr.mxu0 0.0
    %85 = vmatpush2.msra.mxu0 0.0
    %86 = vmatprep.subr.mxu0 0.0
    %87 = vmatpush2.msra.mxu0 0.0
    %88 = vmatprep.subr.mxu0 0.0
    %89 = vmatpush2.msra.mxu0 0.0
    %90 = vmatprep.subr.mxu0 0.0
    %91 = vmatpush2.msra.mxu0 0.0
    %92 = vmatprep.subr.mxu0 0.0
    %93 = vmatpush2.msra.mxu0 0.0
    %94 = vmatprep.subr.mxu0 0.0
    %95 = vmatpush2.msra.mxu0 0.0
    %96 = vmatprep.subr.mxu0 0.0
    %97 = vmatpush2.msra.mxu0 0.0
    %98 = vmatprep.subr.mxu0 0.0
    %99 = vmatpush2.msra.mxu0 0.0
    %100 = vmatprep.subr.mxu0 0.0
    %101 = vmatpush2.msra.mxu0 0.0
    %102 = vmatprep.subr.mxu0 0.0
    %103 = vmatpush2.msra.mxu0 0.0
    %104 = vmatprep.subr.mxu0 0.0
    %105 = vmatpush2.msra.mxu0 0.0
    %106 = vmatprep.subr.mxu0 0.0
    %107 = vmatpush2.msra.mxu0 0.0
    %108 = vmatprep.subr.mxu0 0.0
    %109 = vmatpush2.msra.mxu0 0.0
    %110 = vmatprep.mubr.f32.mxu0 0.0
    %111 = vmatmul.mubr.f32.gmra.mxu0 %v40
    %v112 = vpop.f32.mrf.mxu0
    %v113 = vadd.f32 %v36, %v112
    %v114 = vpop.f32.mrf.mxu0
    %115 = vdwg.mxu0
    %vm116 = vcmask 130048
    %117 = vst.msk [vmem:[#allocation5] sm:$0xff] %vm116, %v113
    // Predicated region
    $region18: #{tpu_custom_call.1} parent=1 // pred_check
      _
    $region19: #{tpu_custom_call.1} parent=1 // pred_check_branch
      %119 = sbr.rel (0) target = $region21
    $region20: #{tpu_custom_call.1} parent=1 // pred_region
      %s121 = ssub.s32 128, 128
      %122 = vsyncadd [#allocation4], %s121
      %s124 = sshll.u32 [#allocation5], 4
      %s125 = int_to_ptr.vmem [resolvable:$true] %s124
      %127 = dma.vmem_to_hbm [thread:$0]  %s125, 128, %s3, [#allocation4]
    $region21: #{tpu_custom_call.1} parent=1 // pred_fallthru
      _
    // Predicated region
    $region22: #{tpu_custom_call.1} parent=1 // pred_check
      _
    $region23: #{tpu_custom_call.1} parent=1 // pred_check_branch
      %129 = sbr.rel (0) target = $region25
    $region24: #{tpu_custom_call.1} parent=1 // pred_region
      %130 = dma.done [#allocation4], 128
    $region25: #{tpu_custom_call.1} parent=1 // pred_fallthru
      _
    %131 = vsyncpa [#allocation3], 1
    %132 = vsyncpa [#allocation4], 1

</llo_original>
